<compile_context>
chip_gen: v5e
topology: v5e:2x2
jax: 0.10.0
libtpu: 0.0.40
codegen_flags: <defaults>
</compile_context>

<pallas_src>
import functools

import jax
import jax.numpy as jnp
from jax.experimental import pallas as pl
from jax.experimental.pallas import tpu as pltpu

_TILE_BYTES = 4 * 1024 * 1024        # ~4 MiB per operand tile
_VMEM_LIMIT_BYTES = 32 * 1024 * 1024  # safe on v5e/v6e/v7x


def _sine_kernel(x_ref, o_ref, *, w0: float):
    # Compute in f32 (no-op cast for f32 inputs), cast back on store.
    x = x_ref[...].astype(jnp.float32)
    o_ref[...] = jnp.sin(jnp.float32(w0) * x).astype(o_ref.dtype)


def _cdiv(a: int, b: int) -> int:
    return -(-a // b)


def _round_up(n: int, m: int) -> int:
    return ((n + m - 1) // m) * m


def _pick_block_rows(rows: int, cols: int, itemsize: int, tile_bytes: int,
                     sub: int) -> int:
    """Row-block size: ~tile_bytes per tile, multiple of `sub`, and at least
    2 (even count of) blocks when possible so v7x's two TCs both get work."""
    if rows <= sub:
        return sub
    target = max(sub, tile_bytes // max(1, cols * itemsize))
    nblk = max(2, _cdiv(rows, target))
    if nblk % 2:
        nblk += 1
    brows = _round_up(_cdiv(rows, nblk), sub)
    return max(sub, min(brows, _round_up(rows, sub)))


def sine(x: jax.Array, w0: float = 1.0, *, tile_bytes: int = _TILE_BYTES,
         inplace: bool = False) -> jax.Array:
    """Elementwise sin(w0 * x) via a tiled Pallas TPU kernel.

    Any-rank input is flattened (zero-copy reshape) to a lane-dense 2-D
    (rows, cols) slab when the element count is 128-aligned; the original
    shape is restored afterwards.  Unaligned totals fall back to a padded
    path (one extra HBM pass) — rare for SIREN hidden widths.
    """
    if not jnp.issubdtype(x.dtype, jnp.floating):
        raise TypeError(f"sine expects a floating dtype, got {x.dtype}")

    orig_shape = x.shape
    n = x.size
    if n == 0:
        return x

    itemsize = x.dtype.itemsize
    # Sublane granularity per dtype packing (f32: 8, bf16/fp16: 16, fp8: 32).
    sub = 8 if itemsize >= 4 else (16 if itemsize == 2 else 32)

    if n % 128 == 0:
        # Fast path: zero-copy reshape, no padding, no output slice.
        cols = next(c for c in (1024, 512, 256, 128) if n % c == 0)
        rows = n // cols
        x2 = x.reshape(rows, cols)
        pad = 0
    else:
        # Fallback for unaligned totals: pad the tiny flat tail.
        # TODO(synk): for very large unaligned tensors, a separate tail-slab
        # call would avoid the full-array pad/slice HBM passes.
        cols = min(1024, max(128, _round_up(n, 128)))
        pad = (-n) % cols
        xf = jnp.pad(x.reshape(-1), (0, pad))
        rows = xf.size // cols
        x2 = xf.reshape(rows, cols)

    brows = _pick_block_rows(rows, cols, itemsize, tile_bytes, sub)
    grid = (_cdiv(rows, brows),)

    kernel = functools.partial(_sine_kernel, w0=float(w0))
    cost = pl.CostEstimate(flops=n, transcendentals=n,
                           bytes_accessed=2 * n * itemsize)

    out = pl.pallas_call(
        kernel,
        out_shape=jax.ShapeDtypeStruct((rows, cols), x.dtype),
        grid=grid,
        in_specs=[pl.BlockSpec((brows, cols), lambda i: (i, 0))],
        out_specs=pl.BlockSpec((brows, cols), lambda i: (i, 0)),
        compiler_params=pltpu.CompilerParams(
            dimension_semantics=("parallel",),
            vmem_limit_bytes=_VMEM_LIMIT_BYTES),
        cost_estimate=cost,
        input_output_aliases=({0: 0} if (inplace and pad == 0) else {}),
    )(x2)

    if pad:
        out = out.reshape(-1)[:n]
    return out.reshape(orig_shape)


if __name__ == "__main__":
    key = jax.random.PRNGKey(0)
    # Small shape consistent with a SIREN activation tensor (aligned path).
    x = jax.random.normal(key, (2, 4, 16, 16), dtype=jnp.float32)
    w0 = 30.0  # typical SIREN w0; module default 1.0 also supported

    y = jax.block_until_ready(sine(x, w0=w0))
    ref = jnp.sin(w0 * x)
    assert y.shape == x.shape and y.dtype == x.dtype
    assert jnp.allclose(y, ref, atol=1e-5, rtol=1e-5)

    # Default w0=1.0 path.
    y1 = jax.block_until_ready(sine(x))
    assert jnp.allclose(y1, jnp.sin(x), atol=1e-5, rtol=1e-5)

    # Larger aligned case -> multi-block (even) grid, zero-copy flatten.
    x3 = jax.random.normal(jax.random.PRNGKey(2), (16, 64, 256),
                           dtype=jnp.float32)
    y3 = jax.block_until_ready(sine(x3, w0=w0))
    assert jnp.allclose(y3, jnp.sin(w0 * x3), atol=1e-5, rtol=1e-5)

    # bf16 aligned case: f32-compute-then-cast path and bf16 sublane packing.
    xb = jax.random.normal(jax.random.PRNGKey(1), (4, 8, 64),
                           dtype=jnp.bfloat16)
    yb = jax.block_until_ready(sine(xb, w0=w0))
    refb = jnp.sin(w0 * xb.astype(jnp.float32)).astype(jnp.bfloat16)
    assert yb.shape == xb.shape and yb.dtype == xb.dtype
    assert jnp.allclose(yb.astype(jnp.float32), refb.astype(jnp.float32),
                        atol=2e-2, rtol=2e-2)

    # Awkward (non-128-multiple) total size exercises the pad fallback and
    # the ragged last row-block.
    xu = jax.random.normal(jax.random.PRNGKey(3), (3, 5, 33, 17),
                           dtype=jnp.float32)
    yu = jax.block_until_ready(sine(xu, w0=w0))
    assert jnp.allclose(yu, jnp.sin(w0 * xu), atol=1e-5, rtol=1e-5)

    print("KERNEL_OK")
</pallas_src>

<mosaic_0001>
module attributes {stable_mosaic.version = 11 : i64} {
  func.func @_sine_kernel(%arg0: i32, %arg1: memref<8x1024xf32, #tpu.memory_space<vmem>>, %arg2: memref<8x1024xf32, #tpu.memory_space<vmem>>) attributes {dimension_semantics = [#tpu.dimension_semantics<parallel>], iteration_bounds = array<i64: 1>, scalar_prefetch = 0 : i64, scratch_operands = 0 : i64, tpu.core_type = #tpu.core_type<tc>, window_params = [{transform_indices = @transform_0, window_bounds = array<i64: 8, 1024>}, {transform_indices = @transform_1, window_bounds = array<i64: 8, 1024>}]} {
    %c0 = arith.constant 0 : index
    %c0_0 = arith.constant 0 : index
    %0 = vector.load %arg1[%c0, %c0_0] : memref<8x1024xf32, #tpu.memory_space<vmem>>, vector<8x1024xf32>
    %cst = arith.constant 3.000000e+01 : f32
    %1 = vector.broadcast %cst : f32 to vector<8x1024xf32>
    %2 = arith.mulf %1, %0 : vector<8x1024xf32>
    %3 = math.sin %2 : vector<8x1024xf32>
    %c0_1 = arith.constant 0 : index
    %c0_2 = arith.constant 0 : index
    %4 = vector.load %arg2[%c0_1, %c0_2] : memref<8x1024xf32, #tpu.memory_space<vmem>>, vector<8x1024xf32>
    tpu.vector_store %arg2[%c0_1, %c0_2], %3 {strides = array<i32>} : memref<8x1024xf32, #tpu.memory_space<vmem>>, vector<8x1024xf32>,
    return
  }
  func.func @transform_0(%arg0: i32) -> (i32, i32) {
    %c0_i32 = arith.constant 0 : i32
    %c0_i32_0 = arith.constant 0 : i32
    return %arg0, %c0_i32 : i32, i32
  }
  func.func @transform_1(%arg0: i32) -> (i32, i32) {
    %c0_i32 = arith.constant 0 : i32
    %c0_i32_0 = arith.constant 0 : i32
    return %arg0, %c0_i32 : i32, i32
  }
}

</mosaic_0001>

<llo_original>
// kernel: tpu_custom_call.1
$region0: #{tpu_custom_call.1}
  #allocation0 [shape = 'u32[]', space=smem, size = 0x4, offset = 0x4, fixed_abs, tag = 'smem constant byte address 0x4 - core index']
  #allocation1 [shape = 'u32[72,128]{1,0:T(1,128)}', space=vmem, size = 0x9000, scoped, tag = 'internal scratch']
  %s0 = inlined_call_operand.hbm [shape: f32[2,1024], index: 0, kind: input, shape index: {}]
  %s1 = inlined_call_operand.hbm [shape: f32[2,1024], index: 1, kind: output, shape index: {}]
  %s2 = sld [smem:[#allocation0]]
  $region18: #{tpu_custom_call.1} parent=0
    _
  %s4 = ssub.s32 1, %s2
  %s5 = scalar_select 0, %s4, %s2
  $region1: #{tpu_custom_call.1} parent=0
    #allocation2 [shape = 'u8[32768]{0}', space=vmem, size = 0x8000, scoped, tag = 'input window, operand 0, single buffered']
    #allocation3 [shape = 's32[1]{0}', space=sflag, size = 0x4, scoped, tag = 'scoped memory for tpu_custom_call.1']
    #allocation4 [shape = 's32[1]{0}', space=sflag, size = 0x4, scoped, tag = 'scoped memory for tpu_custom_call.1']
    #allocation5 [shape = 'u8[32768]{0}', space=vmem, size = 0x8000, scoped, tag = 'output window, operand 0, single buffered']
    %6 = vsyncpa [#allocation3], 0
    %7 = vsyncpa [#allocation4], 0
    // Predicated region
    $region2: #{tpu_custom_call.1} parent=1 // pred_check
      _
    $region3: #{tpu_custom_call.1} parent=1 // pred_check_branch
      %9 = sbr.rel (0) target = $region5
    $region4: #{tpu_custom_call.1} parent=1 // pred_region
      %11 = vsyncadd [#allocation3], 768
      %s12 = sshll.u32 %s0, 4
      %s13 = int_to_ptr.hbm [resolvable:$true] %s12
      %s14 = sshll.u32 [#allocation2], 4
      %s15 = int_to_ptr.vmem [resolvable:$true] %s14
      %20 = dma.hbm_to_vmem [thread:$0]  %s13, 256, %s15, [#allocation3], 256, 256, 16
    $region5: #{tpu_custom_call.1} parent=1 // pred_fallthru
      _
    // Predicated region
    $region6: #{tpu_custom_call.1} parent=1 // pred_check
      _
    $region7: #{tpu_custom_call.1} parent=1 // pred_check_branch
      %22 = sbr.rel (0) target = $region9
    $region8: #{tpu_custom_call.1} parent=1 // pred_region
      %24 = dma.done [#allocation3], 1024
    $region9: #{tpu_custom_call.1} parent=1 // pred_fallthru
      _
    %v25 = vld [vmem:[#allocation2] sm:$0xff]
    %v26 = vld [vmem:[#allocation2 + $0x8] sm:$0xff]
    %v27 = vld [vmem:[#allocation2 + $0x10] sm:$0xff]
    %v28 = vld [vmem:[#allocation2 + $0x18] sm:$0xff]
    %v29 = vld [vmem:[#allocation2 + $0x20] sm:$0xff]
    %v30 = vld [vmem:[#allocation2 + $0x28] sm:$0xff]
    %v31 = vld [vmem:[#allocation2 + $0x30] sm:$0xff]
    %v32 = vld [vmem:[#allocation2 + $0x38] sm:$0xff]
    %v33 = vmul.f32 %v25, 30.0
    %v34 = vmul.f32 %v26, 30.0
    %v35 = vmul.f32 %v27, 30.0
    %v36 = vmul.f32 %v28, 30.0
    %v37 = vmul.f32 %v29, 30.0
    %v38 = vmul.f32 %v30, 30.0
    %v39 = vmul.f32 %v31, 30.0
    %v40 = vmul.f32 %v32, 30.0
    %v41 = vand.u32 2147483647, %v33
    %vm42 = vcmp.le.f32.partialorder %v41, 0.7853982
    %vm43 = vcmp.lt.s32.totalorder %v33, 0
    %v44 = vand.u32 %v33, 2139095040
    %v45 = vshrl.u32 %v44, 23
    %v46 = vsub.s32 %v45, 127
    %v47 = vand.u32 2147483647, %v33
    %v48 = vand.u32 %v47, 8388607
    %v49 = vor.u32 %v48, 8388608
    %v50 = vsub.s32 0, %v49
    %v51 = vadd.s32 %v46, 1
    %vm52 = vcmp.gt.s32.totalorder %v51, 0
    %v53 = vsel %vm52, %v51, 0
    %v54 = vshrl.u32 %v53, 5
    %v55 = vand.u32 %v53, 31
    %v56 = vsub.s32 32, %v55
    %v57 = vshrl.u32 683565275, %v56
    %v58 = vshll.u32 683565275, %v55
    %v59 = vshrl.u32 2475754826, %v56
    %v60 = vor.u32 %v58, %v59
    %v61 = vshll.u32 2475754826, %v55
    %v62 = vshrl.u32 2131351028, %v56
    %v63 = vor.u32 %v61, %v62
    %v64 = vshll.u32 2131351028, %v55
    %v65 = vshrl.u32 2102212464, %v56
    %v66 = vor.u32 %v64, %v65
    %v67 = vshll.u32 2102212464, %v55
    %v68 = vshrl.u32 920167782, %v56
    %v69 = vor.u32 %v67, %v68
    %v70 = vshll.u32 920167782, %v55
    %v71 = vshrl.u32 1326507024, %v56
    %v72 = vor.u32 %v70, %v71
    %vm73 = vcmp.lt.s32.totalorder %v54, 1
    %vm74 = vcmp.lt.s32.totalorder %v54, 2
    %vm75 = vcmp.lt.s32.totalorder %v54, 3
    %vm76 = vcmp.lt.s32.totalorder %v54, 4
    %v77 = vsel %vm73, %v57, %v60
    %v78 = vsel %vm76, %v66, 2102212464
    %v79 = vsel %vm75, %v63, %v78
    %v80 = vsel %vm74, %v77, %v79
    %v81 = vsel %vm73, %v60, %v63
    %v82 = vsel %vm76, %v69, 920167782
    %v83 = vsel %vm75, %v66, %v82
    %v84 = vsel %vm74, %v81, %v83
    %v85 = vsel %vm73, %v63, %v66
    %v86 = vsel %vm76, %v72, 1326507024
    %v87 = vsel %vm75, %v69, %v86
    %v88 = vsel %vm74, %v85, %v87
    %v89 = vshll.u32 %v49, 8
    %v90 = vand.u32 %v89, 65535
    %v91 = vshrl.u32 %v89, 16
    %v92 = vand.u32 %v88, 65535
    %v93 = vshrl.u32 %v88, 16
    %v94 = vmul.u32 %v90, %v92
    %v95 = vmul.u32 %v90, %v93
    %v96 = vmul.u32 %v91, %v92
    %v97 = vmul.u32 %v91, %v93
    %v98 = vshll.u32 %v95, 16
    %v99 = vshrl.u32 %v95, 16
    %v100 = vshll.u32 %v96, 16
    %v101 = vshrl.u32 %v96, 16
    %vm102 = vc.u32 %v94, %v98
    %v103 = vsel %vm102, 1, 0
    %v104 = vadd.s32 %v94, %v98
    %v105 = vadd.s32 %v97, %v103
    %vm106 = vc.u32 %v104, %v100
    %v107 = vsel %vm106, 1, 0
    %v108 = vadd.s32 %v104, %v100
    %v109 = vadd.s32 %v105, %v107
    %v110 = vadd.s32 %v109, %v99
    %v111 = vadd.s32 %v110, %v101
    %v112 = vand.u32 %v89, 65535
    %v113 = vshrl.u32 %v89, 16
    %v114 = vand.u32 %v84, 65535
    %v115 = vshrl.u32 %v84, 16
    %v116 = vmul.u32 %v112, %v114
    %v117 = vmul.u32 %v112, %v115
    %v118 = vmul.u32 %v113, %v114
    %v119 = vmul.u32 %v113, %v115
    %v120 = vshll.u32 %v117, 16
    %v121 = vshrl.u32 %v117, 16
    %v122 = vshll.u32 %v118, 16
    %v123 = vshrl.u32 %v118, 16
    %vm124 = vc.u32 %v116, %v120
    %v125 = vsel %vm124, 1, 0
    %v126 = vadd.s32 %v116, %v120
    %v127 = vadd.s32 %v119, %v125
    %vm128 = vc.u32 %v126, %v122
    %v129 = vsel %vm128, 1, 0
    %v130 = vadd.s32 %v126, %v122
    %v131 = vadd.s32 %v127, %v129
    %v132 = vadd.s32 %v131, %v121
    %v133 = vadd.s32 %v132, %v123
    %v134 = vmul.u32 %v89, %v80
    %v135 = vadd.s32 %v111, %v130
    %vm136 = vc.u32 %v111, %v130
    %v137 = vadd.s32 %v133, 1
    %v138 = vsel %vm136, %v137, %v133
    %v139 = vadd.s32 %v134, %v138
    %v140 = vadd.s32 %v139, 536870912
    %v141 = vshrl.u32 %v140, 30
    %v142 = vshll.u32 %v141, 30
    %v143 = vsub.s32 %v139, %v142
    %vm144 = vcmp.lt.s32.totalorder %v143, 0
    %v145 = vsub.s32 0, %v143
    %v146 = vsel %vm144, %v145, %v143
    %v147 = vclz %v146
    %v148 = vsub.s32 %v147, 2
    %vm149 = vcmp.gt.s32.totalorder 0, %v148
    %v150 = vsel %vm149, 0, %v148
    %v151 = vsub.s32 32, %v150
    %v152 = vshll.u32 %v143, %v150
    %v153 = vshrl.u32 %v135, %v151
    %v154 = vor.u32 %v152, %v153
    %v155 = vsub.s32 4294967266, %v150
    %v156 = vadd.s32 %v155, 127
    %v157 = vshll.u32 %v156, 23
    %v158 = vor.u32 4788187, %v157
    %v159 = vand.u32 2147483647, %v158
    %v161 = vcvt.s32.f32 %v154
    %v162 = vmul.f32 %v161, %v159
    %v163 = vxor.u32 %v162, 2147483648
    %v164 = vsel %vm43, %v163, %v162
    %v165 = vsub.s32 4, %v141
    %v166 = vsel %vm43, %v165, %v141
    %v167 = vsel %vm42, %v33, %v164
    %v168 = vsel %vm42, 0, %v166
    %v169 = vmul.f32 %v167, %v167
    %v170 = vmul.f32 %v169, -0.001358992
    %v171 = vadd.f32 %v170, 0.041655596
    %v172 = vmul.f32 %v169, %v171
    %v173 = vadd.f32 %v172, -0.4999988
    %v174 = vmul.f32 %v169, %v173
    %v175 = vadd.f32 1.0, %v174
    %v176 = vmul.f32 %v167, %v167
    %v177 = vmul.f32 %v176, -0.00019511016
    %v178 = vadd.f32 %v177, 0.008332121
    %v179 = vmul.f32 %v176, %v178
    %v180 = vadd.f32 %v179, -0.16666654
    %v181 = vmul.f32 %v176, %v180
    %v182 = vadd.f32 %v181, 1.0
    %v183 = vmul.f32 %v182, %v167
    %vm184 = vweird.f32 %v33
    %v185 = vadd.s32 %v168, 3
    %v186 = vand.u32 %v185, 3
    %vm187 = vcmp.lt.s32.totalorder %v186, 2
    %vm188 = vcmp.eq.s32.totalorder %v186, 0
    %v189 = vxor.u32 %v183, 2147483648
    %v190 = vsel %vm188, %v175, %v189
    %vm191 = vcmp.eq.s32.totalorder %v186, 2
    %v192 = vxor.u32 %v175, 2147483648
    %v193 = vsel %vm191, %v192, %v183
    %v194 = vsel %vm187, %v190, %v193
    %v195 = vsel %vm184, nan, %v194
    %v196 = vand.u32 2147483647, %v34
    %vm197 = vcmp.le.f32.partialorder %v196, 0.7853982
    %vm198 = vcmp.lt.s32.totalorder %v34, 0
    %v199 = vand.u32 %v34, 2139095040
    %v200 = vshrl.u32 %v199, 23
    %v201 = vsub.s32 %v200, 127
    %v202 = vand.u32 2147483647, %v34
    %v203 = vand.u32 %v202, 8388607
    %v204 = vor.u32 %v203, 8388608
    %v205 = vsub.s32 0, %v204
    %v206 = vadd.s32 %v201, 1
    %vm207 = vcmp.gt.s32.totalorder %v206, 0
    %v208 = vsel %vm207, %v206, 0
    %v209 = vshrl.u32 %v208, 5
    %v210 = vand.u32 %v208, 31
    %v211 = vsub.s32 32, %v210
    %v212 = vshrl.u32 683565275, %v211
    %v213 = vshll.u32 683565275, %v210
    %v214 = vshrl.u32 2475754826, %v211
    %v215 = vor.u32 %v213, %v214
    %v216 = vshll.u32 2475754826, %v210
    %v217 = vshrl.u32 2131351028, %v211
    %v218 = vor.u32 %v216, %v217
    %v219 = vshll.u32 2131351028, %v210
    %v220 = vshrl.u32 2102212464, %v211
    %v221 = vor.u32 %v219, %v220
    %v222 = vshll.u32 2102212464, %v210
    %v223 = vshrl.u32 920167782, %v211
    %v224 = vor.u32 %v222, %v223
    %v225 = vshll.u32 920167782, %v210
    %v226 = vshrl.u32 1326507024, %v211
    %v227 = vor.u32 %v225, %v226
    %vm228 = vcmp.lt.s32.totalorder %v209, 1
    %vm229 = vcmp.lt.s32.totalorder %v209, 2
    %vm230 = vcmp.lt.s32.totalorder %v209, 3
    %vm231 = vcmp.lt.s32.totalorder %v209, 4
    %v232 = vsel %vm228, %v212, %v215
    %v233 = vsel %vm231, %v221, 2102212464
    %v234 = vsel %vm230, %v218, %v233
    %v235 = vsel %vm229, %v232, %v234
    %v236 = vsel %vm228, %v215, %v218
    %v237 = vsel %vm231, %v224, 920167782
    %v238 = vsel %vm230, %v221, %v237
    %v239 = vsel %vm229, %v236, %v238
    %v240 = vsel %vm228, %v218, %v221
    %v241 = vsel %vm231, %v227, 1326507024
    %v242 = vsel %vm230, %v224, %v241
    %v243 = vsel %vm229, %v240, %v242
    %v244 = vshll.u32 %v204, 8
    %v245 = vand.u32 %v244, 65535
    %v246 = vshrl.u32 %v244, 16
    %v247 = vand.u32 %v243, 65535
    %v248 = vshrl.u32 %v243, 16
    %v249 = vmul.u32 %v245, %v247
    %v250 = vmul.u32 %v245, %v248
    %v251 = vmul.u32 %v246, %v247
    %v252 = vmul.u32 %v246, %v248
    %v253 = vshll.u32 %v250, 16
    %v254 = vshrl.u32 %v250, 16
    %v255 = vshll.u32 %v251, 16
    %v256 = vshrl.u32 %v251, 16
    %vm257 = vc.u32 %v249, %v253
    %v258 = vsel %vm257, 1, 0
    %v259 = vadd.s32 %v249, %v253
    %v260 = vadd.s32 %v252, %v258
    %vm261 = vc.u32 %v259, %v255
    %v262 = vsel %vm261, 1, 0
    %v263 = vadd.s32 %v259, %v255
    %v264 = vadd.s32 %v260, %v262
    %v265 = vadd.s32 %v264, %v254
    %v266 = vadd.s32 %v265, %v256
    %v267 = vand.u32 %v244, 65535
    %v268 = vshrl.u32 %v244, 16
    %v269 = vand.u32 %v239, 65535
    %v270 = vshrl.u32 %v239, 16
    %v271 = vmul.u32 %v267, %v269
    %v272 = vmul.u32 %v267, %v270
    %v273 = vmul.u32 %v268, %v269
    %v274 = vmul.u32 %v268, %v270
    %v275 = vshll.u32 %v272, 16
    %v276 = vshrl.u32 %v272, 16
    %v277 = vshll.u32 %v273, 16
    %v278 = vshrl.u32 %v273, 16
    %vm279 = vc.u32 %v271, %v275
    %v280 = vsel %vm279, 1, 0
    %v281 = vadd.s32 %v271, %v275
    %v282 = vadd.s32 %v274, %v280
    %vm283 = vc.u32 %v281, %v277
    %v284 = vsel %vm283, 1, 0
    %v285 = vadd.s32 %v281, %v277
    %v286 = vadd.s32 %v282, %v284
    %v287 = vadd.s32 %v286, %v276
    %v288 = vadd.s32 %v287, %v278
    %v289 = vmul.u32 %v244, %v235
    %v290 = vadd.s32 %v266, %v285
    %vm291 = vc.u32 %v266, %v285
    %v292 = vadd.s32 %v288, 1
    %v293 = vsel %vm291, %v292, %v288
    %v294 = vadd.s32 %v289, %v293
    %v295 = vadd.s32 %v294, 536870912
    %v296 = vshrl.u32 %v295, 30
    %v297 = vshll.u32 %v296, 30
    %v298 = vsub.s32 %v294, %v297
    %vm299 = vcmp.lt.s32.totalorder %v298, 0
    %v300 = vsub.s32 0, %v298
    %v301 = vsel %vm299, %v300, %v298
    %v302 = vclz %v301
    %v303 = vsub.s32 %v302, 2
    %vm304 = vcmp.gt.s32.totalorder 0, %v303
    %v305 = vsel %vm304, 0, %v303
    %v306 = vsub.s32 32, %v305
    %v307 = vshll.u32 %v298, %v305
    %v308 = vshrl.u32 %v290, %v306
    %v309 = vor.u32 %v307, %v308
    %v310 = vsub.s32 4294967266, %v305
    %v311 = vadd.s32 %v310, 127
    %v312 = vshll.u32 %v311, 23
    %v313 = vor.u32 4788187, %v312
    %v314 = vand.u32 2147483647, %v313
    %v316 = vcvt.s32.f32 %v309
    %v317 = vmul.f32 %v316, %v314
    %v318 = vxor.u32 %v317, 2147483648
    %v319 = vsel %vm198, %v318, %v317
    %v320 = vsub.s32 4, %v296
    %v321 = vsel %vm198, %v320, %v296
    %v322 = vsel %vm197, %v34, %v319
    %v323 = vsel %vm197, 0, %v321
    %v324 = vmul.f32 %v322, %v322
    %v325 = vmul.f32 %v324, -0.001358992
    %v326 = vadd.f32 %v325, 0.041655596
    %v327 = vmul.f32 %v324, %v326
    %v328 = vadd.f32 %v327, -0.4999988
    %v329 = vmul.f32 %v324, %v328
    %v330 = vadd.f32 1.0, %v329
    %v331 = vmul.f32 %v322, %v322
    %v332 = vmul.f32 %v331, -0.00019511016
    %v333 = vadd.f32 %v332, 0.008332121
    %v334 = vmul.f32 %v331, %v333
    %v335 = vadd.f32 %v334, -0.16666654
    %v336 = vmul.f32 %v331, %v335
    %v337 = vadd.f32 %v336, 1.0
    %v338 = vmul.f32 %v337, %v322
    %vm339 = vweird.f32 %v34
    %v340 = vadd.s32 %v323, 3
    %v341 = vand.u32 %v340, 3
    %vm342 = vcmp.lt.s32.totalorder %v341, 2
    %vm343 = vcmp.eq.s32.totalorder %v341, 0
    %v344 = vxor.u32 %v338, 2147483648
    %v345 = vsel %vm343, %v330, %v344
    %vm346 = vcmp.eq.s32.totalorder %v341, 2
    %v347 = vxor.u32 %v330, 2147483648
    %v348 = vsel %vm346, %v347, %v338
    %v349 = vsel %vm342, %v345, %v348
    %v350 = vsel %vm339, nan, %v349
    %v351 = vand.u32 2147483647, %v35
    %vm352 = vcmp.le.f32.partialorder %v351, 0.7853982
    %vm353 = vcmp.lt.s32.totalorder %v35, 0
    %v354 = vand.u32 %v35, 2139095040
    %v355 = vshrl.u32 %v354, 23
    %v356 = vsub.s32 %v355, 127
    %v357 = vand.u32 2147483647, %v35
    %v358 = vand.u32 %v357, 8388607
    %v359 = vor.u32 %v358, 8388608
    %v360 = vsub.s32 0, %v359
    %v361 = vadd.s32 %v356, 1
    %vm362 = vcmp.gt.s32.totalorder %v361, 0
    %v363 = vsel %vm362, %v361, 0
    %v364 = vshrl.u32 %v363, 5
    %v365 = vand.u32 %v363, 31
    %v366 = vsub.s32 32, %v365
    %v367 = vshrl.u32 683565275, %v366
    %v368 = vshll.u32 683565275, %v365
    %v369 = vshrl.u32 2475754826, %v366
    %v370 = vor.u32 %v368, %v369
    %v371 = vshll.u32 2475754826, %v365
    %v372 = vshrl.u32 2131351028, %v366
    %v373 = vor.u32 %v371, %v372
    %v374 = vshll.u32 2131351028, %v365
    %v375 = vshrl.u32 2102212464, %v366
    %v376 = vor.u32 %v374, %v375
    %v377 = vshll.u32 2102212464, %v365
    %v378 = vshrl.u32 920167782, %v366
    %v379 = vor.u32 %v377, %v378
    %v380 = vshll.u32 920167782, %v365
    %v381 = vshrl.u32 1326507024, %v366
    %v382 = vor.u32 %v380, %v381
    %vm383 = vcmp.lt.s32.totalorder %v364, 1
    %vm384 = vcmp.lt.s32.totalorder %v364, 2
    %vm385 = vcmp.lt.s32.totalorder %v364, 3
    %vm386 = vcmp.lt.s32.totalorder %v364, 4
    %v387 = vsel %vm383, %v367, %v370
    %v388 = vsel %vm386, %v376, 2102212464
    %v389 = vsel %vm385, %v373, %v388
    %v390 = vsel %vm384, %v387, %v389
    %v391 = vsel %vm383, %v370, %v373
    %v392 = vsel %vm386, %v379, 920167782
    %v393 = vsel %vm385, %v376, %v392
    %v394 = vsel %vm384, %v391, %v393
    %v395 = vsel %vm383, %v373, %v376
    %v396 = vsel %vm386, %v382, 1326507024
    %v397 = vsel %vm385, %v379, %v396
    %v398 = vsel %vm384, %v395, %v397
    %v399 = vshll.u32 %v359, 8
    %v400 = vand.u32 %v399, 65535
    %v401 = vshrl.u32 %v399, 16
    %v402 = vand.u32 %v398, 65535
    %v403 = vshrl.u32 %v398, 16
    %v404 = vmul.u32 %v400, %v402
    %v405 = vmul.u32 %v400, %v403
    %v406 = vmul.u32 %v401, %v402
    %v407 = vmul.u32 %v401, %v403
    %v408 = vshll.u32 %v405, 16
    %v409 = vshrl.u32 %v405, 16
    %v410 = vshll.u32 %v406, 16
    %v411 = vshrl.u32 %v406, 16
    %vm412 = vc.u32 %v404, %v408
    %v413 = vsel %vm412, 1, 0
    %v414 = vadd.s32 %v404, %v408
    %v415 = vadd.s32 %v407, %v413
    %vm416 = vc.u32 %v414, %v410
    %v417 = vsel %vm416, 1, 0
    %v418 = vadd.s32 %v414, %v410
    %v419 = vadd.s32 %v415, %v417
    %v420 = vadd.s32 %v419, %v409
    %v421 = vadd.s32 %v420, %v411
    %v422 = vand.u32 %v399, 65535
    %v423 = vshrl.u32 %v399, 16
    %v424 = vand.u32 %v394, 65535
    %v425 = vshrl.u32 %v394, 16
    %v426 = vmul.u32 %v422, %v424
    %v427 = vmul.u32 %v422, %v425
    %v428 = vmul.u32 %v423, %v424
    %v429 = vmul.u32 %v423, %v425
    %v430 = vshll.u32 %v427, 16
    %v431 = vshrl.u32 %v427, 16
    %v432 = vshll.u32 %v428, 16
    %v433 = vshrl.u32 %v428, 16
    %vm434 = vc.u32 %v426, %v430
    %v435 = vsel %vm434, 1, 0
    %v436 = vadd.s32 %v426, %v430
    %v437 = vadd.s32 %v429, %v435
    %vm438 = vc.u32 %v436, %v432
    %v439 = vsel %vm438, 1, 0
    %v440 = vadd.s32 %v436, %v432
    %v441 = vadd.s32 %v437, %v439
    %v442 = vadd.s32 %v441, %v431
    %v443 = vadd.s32 %v442, %v433
    %v444 = vmul.u32 %v399, %v390
    %v445 = vadd.s32 %v421, %v440
    %vm446 = vc.u32 %v421, %v440
    %v447 = vadd.s32 %v443, 1
    %v448 = vsel %vm446, %v447, %v443
    %v449 = vadd.s32 %v444, %v448
    %v450 = vadd.s32 %v449, 536870912
    %v451 = vshrl.u32 %v450, 30
    %v452 = vshll.u32 %v451, 30
    %v453 = vsub.s32 %v449, %v452
    %vm454 = vcmp.lt.s32.totalorder %v453, 0
    %v455 = vsub.s32 0, %v453
    %v456 = vsel %vm454, %v455, %v453
    %v457 = vclz %v456
    %v458 = vsub.s32 %v457, 2
    %vm459 = vcmp.gt.s32.totalorder 0, %v458
    %v460 = vsel %vm459, 0, %v458
    %v461 = vsub.s32 32, %v460
    %v462 = vshll.u32 %v453, %v460
    %v463 = vshrl.u32 %v445, %v461
    %v464 = vor.u32 %v462, %v463
    %v465 = vsub.s32 4294967266, %v460
    %v466 = vadd.s32 %v465, 127
    %v467 = vshll.u32 %v466, 23
    %v468 = vor.u32 4788187, %v467
    %v469 = vand.u32 2147483647, %v468
    %v471 = vcvt.s32.f32 %v464
    %v472 = vmul.f32 %v471, %v469
    %v473 = vxor.u32 %v472, 2147483648
    %v474 = vsel %vm353, %v473, %v472
    %v475 = vsub.s32 4, %v451
    %v476 = vsel %vm353, %v475, %v451
    %v477 = vsel %vm352, %v35, %v474
    %v478 = vsel %vm352, 0, %v476
    %v479 = vmul.f32 %v477, %v477
    %v480 = vmul.f32 %v479, -0.001358992
    %v481 = vadd.f32 %v480, 0.041655596
    %v482 = vmul.f32 %v479, %v481
    %v483 = vadd.f32 %v482, -0.4999988
    %v484 = vmul.f32 %v479, %v483
    %v485 = vadd.f32 1.0, %v484
    %v486 = vmul.f32 %v477, %v477
    %v487 = vmul.f32 %v486, -0.00019511016
    %v488 = vadd.f32 %v487, 0.008332121
    %v489 = vmul.f32 %v486, %v488
    %v490 = vadd.f32 %v489, -0.16666654
    %v491 = vmul.f32 %v486, %v490
    %v492 = vadd.f32 %v491, 1.0
    %v493 = vmul.f32 %v492, %v477
    %vm494 = vweird.f32 %v35
    %v495 = vadd.s32 %v478, 3
    %v496 = vand.u32 %v495, 3
    %vm497 = vcmp.lt.s32.totalorder %v496, 2
    %vm498 = vcmp.eq.s32.totalorder %v496, 0
    %v499 = vxor.u32 %v493, 2147483648
    %v500 = vsel %vm498, %v485, %v499
    %vm501 = vcmp.eq.s32.totalorder %v496, 2
    %v502 = vxor.u32 %v485, 2147483648
    %v503 = vsel %vm501, %v502, %v493
    %v504 = vsel %vm497, %v500, %v503
    %v505 = vsel %vm494, nan, %v504
    %v506 = vand.u32 2147483647, %v36
    %vm507 = vcmp.le.f32.partialorder %v506, 0.7853982
    %vm508 = vcmp.lt.s32.totalorder %v36, 0
    %v509 = vand.u32 %v36, 2139095040
    %v510 = vshrl.u32 %v509, 23
    %v511 = vsub.s32 %v510, 127
    %v512 = vand.u32 2147483647, %v36
    %v513 = vand.u32 %v512, 8388607
    %v514 = vor.u32 %v513, 8388608
    %v515 = vsub.s32 0, %v514
    %v516 = vadd.s32 %v511, 1
    %vm517 = vcmp.gt.s32.totalorder %v516, 0
    %v518 = vsel %vm517, %v516, 0
    %v519 = vshrl.u32 %v518, 5
    %v520 = vand.u32 %v518, 31
    %v521 = vsub.s32 32, %v520
    %v522 = vshrl.u32 683565275, %v521
    %v523 = vshll.u32 683565275, %v520
    %v524 = vshrl.u32 2475754826, %v521
    %v525 = vor.u32 %v523, %v524
    %v526 = vshll.u32 2475754826, %v520
    %v527 = vshrl.u32 2131351028, %v521
    %v528 = vor.u32 %v526, %v527
    %v529 = vshll.u32 2131351028, %v520
    %v530 = vshrl.u32 2102212464, %v521
    %v531 = vor.u32 %v529, %v530
    %v532 = vshll.u32 2102212464, %v520
    %v533 = vshrl.u32 920167782, %v521
    %v534 = vor.u32 %v532, %v533
    %v535 = vshll.u32 920167782, %v520
    %v536 = vshrl.u32 1326507024, %v521
    %v537 = vor.u32 %v535, %v536
    %vm538 = vcmp.lt.s32.totalorder %v519, 1
    %vm539 = vcmp.lt.s32.totalorder %v519, 2
    %vm540 = vcmp.lt.s32.totalorder %v519, 3
    %vm541 = vcmp.lt.s32.totalorder %v519, 4
    %v542 = vsel %vm538, %v522, %v525
    %v543 = vsel %vm541, %v531, 2102212464
    %v544 = vsel %vm540, %v528, %v543
    %v545 = vsel %vm539, %v542, %v544
    %v546 = vsel %vm538, %v525, %v528
    %v547 = vsel %vm541, %v534, 920167782
    %v548 = vsel %vm540, %v531, %v547
    %v549 = vsel %vm539, %v546, %v548
    %v550 = vsel %vm538, %v528, %v531
    %v551 = vsel %vm541, %v537, 1326507024
    %v552 = vsel %vm540, %v534, %v551
    %v553 = vsel %vm539, %v550, %v552
    %v554 = vshll.u32 %v514, 8
    %v555 = vand.u32 %v554, 65535
    %v556 = vshrl.u32 %v554, 16
    %v557 = vand.u32 %v553, 65535
    %v558 = vshrl.u32 %v553, 16
    %v559 = vmul.u32 %v555, %v557
    %v560 = vmul.u32 %v555, %v558
    %v561 = vmul.u32 %v556, %v557
    %v562 = vmul.u32 %v556, %v558
    %v563 = vshll.u32 %v560, 16
    %v564 = vshrl.u32 %v560, 16
    %v565 = vshll.u32 %v561, 16
    %v566 = vshrl.u32 %v561, 16
    %vm567 = vc.u32 %v559, %v563
    %v568 = vsel %vm567, 1, 0
    %v569 = vadd.s32 %v559, %v563
    %v570 = vadd.s32 %v562, %v568
    %vm571 = vc.u32 %v569, %v565
    %v572 = vsel %vm571, 1, 0
    %v573 = vadd.s32 %v569, %v565
    %v574 = vadd.s32 %v570, %v572
    %v575 = vadd.s32 %v574, %v564
    %v576 = vadd.s32 %v575, %v566
    %v577 = vand.u32 %v554, 65535
    %v578 = vshrl.u32 %v554, 16
    %v579 = vand.u32 %v549, 65535
    %v580 = vshrl.u32 %v549, 16
    %v581 = vmul.u32 %v577, %v579
    %v582 = vmul.u32 %v577, %v580
    %v583 = vmul.u32 %v578, %v579
    %v584 = vmul.u32 %v578, %v580
    %v585 = vshll.u32 %v582, 16
    %v586 = vshrl.u32 %v582, 16
    %v587 = vshll.u32 %v583, 16
    %v588 = vshrl.u32 %v583, 16
    %vm589 = vc.u32 %v581, %v585
    %v590 = vsel %vm589, 1, 0
    %v591 = vadd.s32 %v581, %v585
    %v592 = vadd.s32 %v584, %v590
    %vm593 = vc.u32 %v591, %v587
    %v594 = vsel %vm593, 1, 0
    %v595 = vadd.s32 %v591, %v587
    %v596 = vadd.s32 %v592, %v594
    %v597 = vadd.s32 %v596, %v586
    %v598 = vadd.s32 %v597, %v588
    %v599 = vmul.u32 %v554, %v545
    %v600 = vadd.s32 %v576, %v595
    %vm601 = vc.u32 %v576, %v595
    %v602 = vadd.s32 %v598, 1
    %v603 = vsel %vm601, %v602, %v598
    %v604 = vadd.s32 %v599, %v603
    %v605 = vadd.s32 %v604, 536870912
    %v606 = vshrl.u32 %v605, 30
    %v607 = vshll.u32 %v606, 30
    %v608 = vsub.s32 %v604, %v607
    %vm609 = vcmp.lt.s32.totalorder %v608, 0
    %v610 = vsub.s32 0, %v608
    %v611 = vsel %vm609, %v610, %v608
    %v612 = vclz %v611
    %v613 = vsub.s32 %v612, 2
    %vm614 = vcmp.gt.s32.totalorder 0, %v613
    %v615 = vsel %vm614, 0, %v613
    %v616 = vsub.s32 32, %v615
    %v617 = vshll.u32 %v608, %v615
    %v618 = vshrl.u32 %v600, %v616
    %v619 = vor.u32 %v617, %v618
    %v620 = vsub.s32 4294967266, %v615
    %v621 = vadd.s32 %v620, 127
    %v622 = vshll.u32 %v621, 23
    %v623 = vor.u32 4788187, %v622
    %v624 = vand.u32 2147483647, %v623
    %v626 = vcvt.s32.f32 %v619
    %v627 = vmul.f32 %v626, %v624
    %v628 = vxor.u32 %v627, 2147483648
    %v629 = vsel %vm508, %v628, %v627
    %v630 = vsub.s32 4, %v606
    %v631 = vsel %vm508, %v630, %v606
    %v632 = vsel %vm507, %v36, %v629
    %v633 = vsel %vm507, 0, %v631
    %v634 = vmul.f32 %v632, %v632
    %v635 = vmul.f32 %v634, -0.001358992
    %v636 = vadd.f32 %v635, 0.041655596
    %v637 = vmul.f32 %v634, %v636
    %v638 = vadd.f32 %v637, -0.4999988
    %v639 = vmul.f32 %v634, %v638
    %v640 = vadd.f32 1.0, %v639
    %v641 = vmul.f32 %v632, %v632
    %v642 = vmul.f32 %v641, -0.00019511016
    %v643 = vadd.f32 %v642, 0.008332121
    %v644 = vmul.f32 %v641, %v643
    %v645 = vadd.f32 %v644, -0.16666654
    %v646 = vmul.f32 %v641, %v645
    %v647 = vadd.f32 %v646, 1.0
    %v648 = vmul.f32 %v647, %v632
    %vm649 = vweird.f32 %v36
    %v650 = vadd.s32 %v633, 3
    %v651 = vand.u32 %v650, 3
    %vm652 = vcmp.lt.s32.totalorder %v651, 2
    %vm653 = vcmp.eq.s32.totalorder %v651, 0
    %v654 = vxor.u32 %v648, 2147483648
    %v655 = vsel %vm653, %v640, %v654
    %vm656 = vcmp.eq.s32.totalorder %v651, 2
    %v657 = vxor.u32 %v640, 2147483648
    %v658 = vsel %vm656, %v657, %v648
    %v659 = vsel %vm652, %v655, %v658
    %v660 = vsel %vm649, nan, %v659
    %v661 = vand.u32 2147483647, %v37
    %vm662 = vcmp.le.f32.partialorder %v661, 0.7853982
    %vm663 = vcmp.lt.s32.totalorder %v37, 0
    %v664 = vand.u32 %v37, 2139095040
    %v665 = vshrl.u32 %v664, 23
    %v666 = vsub.s32 %v665, 127
    %v667 = vand.u32 2147483647, %v37
    %v668 = vand.u32 %v667, 8388607
    %v669 = vor.u32 %v668, 8388608
    %v670 = vsub.s32 0, %v669
    %v671 = vadd.s32 %v666, 1
    %vm672 = vcmp.gt.s32.totalorder %v671, 0
    %v673 = vsel %vm672, %v671, 0
    %v674 = vshrl.u32 %v673, 5
    %v675 = vand.u32 %v673, 31
    %v676 = vsub.s32 32, %v675
    %v677 = vshrl.u32 683565275, %v676
    %v678 = vshll.u32 683565275, %v675
    %v679 = vshrl.u32 2475754826, %v676
    %v680 = vor.u32 %v678, %v679
    %v681 = vshll.u32 2475754826, %v675
    %v682 = vshrl.u32 2131351028, %v676
    %v683 = vor.u32 %v681, %v682
    %v684 = vshll.u32 2131351028, %v675
    %v685 = vshrl.u32 2102212464, %v676
    %v686 = vor.u32 %v684, %v685
    %v687 = vshll.u32 2102212464, %v675
    %v688 = vshrl.u32 920167782, %v676
    %v689 = vor.u32 %v687, %v688
    %v690 = vshll.u32 920167782, %v675
    %v691 = vshrl.u32 1326507024, %v676
    %v692 = vor.u32 %v690, %v691
    %vm693 = vcmp.lt.s32.totalorder %v674, 1
    %vm694 = vcmp.lt.s32.totalorder %v674, 2
    %vm695 = vcmp.lt.s32.totalorder %v674, 3
    %vm696 = vcmp.lt.s32.totalorder %v674, 4
    %v697 = vsel %vm693, %v677, %v680
    %v698 = vsel %vm696, %v686, 2102212464
    %v699 = vsel %vm695, %v683, %v698
    %v700 = vsel %vm694, %v697, %v699
    %v701 = vsel %vm693, %v680, %v683
    %v702 = vsel %vm696, %v689, 920167782
    %v703 = vsel %vm695, %v686, %v702
    %v704 = vsel %vm694, %v701, %v703
    %v705 = vsel %vm693, %v683, %v686
    %v706 = vsel %vm696, %v692, 1326507024
    %v707 = vsel %vm695, %v689, %v706
    %v708 = vsel %vm694, %v705, %v707
    %v709 = vshll.u32 %v669, 8
    %v710 = vand.u32 %v709, 65535
    %v711 = vshrl.u32 %v709, 16
    %v712 = vand.u32 %v708, 65535
    %v713 = vshrl.u32 %v708, 16
    %v714 = vmul.u32 %v710, %v712
    %v715 = vmul.u32 %v710, %v713
    %v716 = vmul.u32 %v711, %v712
    %v717 = vmul.u32 %v711, %v713
    %v718 = vshll.u32 %v715, 16
    %v719 = vshrl.u32 %v715, 16
    %v720 = vshll.u32 %v716, 16
    %v721 = vshrl.u32 %v716, 16
    %vm722 = vc.u32 %v714, %v718
    %v723 = vsel %vm722, 1, 0
    %v724 = vadd.s32 %v714, %v718
    %v725 = vadd.s32 %v717, %v723
    %vm726 = vc.u32 %v724, %v720
    %v727 = vsel %vm726, 1, 0
    %v728 = vadd.s32 %v724, %v720
    %v729 = vadd.s32 %v725, %v727
    %v730 = vadd.s32 %v729, %v719
    %v731 = vadd.s32 %v730, %v721
    %v732 = vand.u32 %v709, 65535
    %v733 = vshrl.u32 %v709, 16
    %v734 = vand.u32 %v704, 65535
    %v735 = vshrl.u32 %v704, 16
    %v736 = vmul.u32 %v732, %v734
    %v737 = vmul.u32 %v732, %v735
    %v738 = vmul.u32 %v733, %v734
    %v739 = vmul.u32 %v733, %v735
    %v740 = vshll.u32 %v737, 16
    %v741 = vshrl.u32 %v737, 16
    %v742 = vshll.u32 %v738, 16
    %v743 = vshrl.u32 %v738, 16
    %vm744 = vc.u32 %v736, %v740
    %v745 = vsel %vm744, 1, 0
    %v746 = vadd.s32 %v736, %v740
    %v747 = vadd.s32 %v739, %v745
    %vm748 = vc.u32 %v746, %v742
    %v749 = vsel %vm748, 1, 0
    %v750 = vadd.s32 %v746, %v742
    %v751 = vadd.s32 %v747, %v749
    %v752 = vadd.s32 %v751, %v741
    %v753 = vadd.s32 %v752, %v743
    %v754 = vmul.u32 %v709, %v700
    %v755 = vadd.s32 %v731, %v750
    %vm756 = vc.u32 %v731, %v750
    %v757 = vadd.s32 %v753, 1
    %v758 = vsel %vm756, %v757, %v753
    %v759 = vadd.s32 %v754, %v758
    %v760 = vadd.s32 %v759, 536870912
    %v761 = vshrl.u32 %v760, 30
    %v762 = vshll.u32 %v761, 30
    %v763 = vsub.s32 %v759, %v762
    %vm764 = vcmp.lt.s32.totalorder %v763, 0
    %v765 = vsub.s32 0, %v763
    %v766 = vsel %vm764, %v765, %v763
    %v767 = vclz %v766
    %v768 = vsub.s32 %v767, 2
    %vm769 = vcmp.gt.s32.totalorder 0, %v768
    %v770 = vsel %vm769, 0, %v768
    %v771 = vsub.s32 32, %v770
    %v772 = vshll.u32 %v763, %v770
    %v773 = vshrl.u32 %v755, %v771
    %v774 = vor.u32 %v772, %v773
    %v775 = vsub.s32 4294967266, %v770
    %v776 = vadd.s32 %v775, 127
    %v777 = vshll.u32 %v776, 23
    %v778 = vor.u32 4788187, %v777
    %v779 = vand.u32 2147483647, %v778
    %v781 = vcvt.s32.f32 %v774
    %v782 = vmul.f32 %v781, %v779
    %v783 = vxor.u32 %v782, 2147483648
    %v784 = vsel %vm663, %v783, %v782
    %v785 = vsub.s32 4, %v761
    %v786 = vsel %vm663, %v785, %v761
    %v787 = vsel %vm662, %v37, %v784
    %v788 = vsel %vm662, 0, %v786
    %v789 = vmul.f32 %v787, %v787
    %v790 = vmul.f32 %v789, -0.001358992
    %v791 = vadd.f32 %v790, 0.041655596
    %v792 = vmul.f32 %v789, %v791
    %v793 = vadd.f32 %v792, -0.4999988
    %v794 = vmul.f32 %v789, %v793
    %v795 = vadd.f32 1.0, %v794
    %v796 = vmul.f32 %v787, %v787
    %v797 = vmul.f32 %v796, -0.00019511016
    %v798 = vadd.f32 %v797, 0.008332121
    %v799 = vmul.f32 %v796, %v798
    %v800 = vadd.f32 %v799, -0.16666654
    %v801 = vmul.f32 %v796, %v800
    %v802 = vadd.f32 %v801, 1.0
    %v803 = vmul.f32 %v802, %v787
    %vm804 = vweird.f32 %v37
    %v805 = vadd.s32 %v788, 3
    %v806 = vand.u32 %v805, 3
    %vm807 = vcmp.lt.s32.totalorder %v806, 2
    %vm808 = vcmp.eq.s32.totalorder %v806, 0
    %v809 = vxor.u32 %v803, 2147483648
    %v810 = vsel %vm808, %v795, %v809
    %vm811 = vcmp.eq.s32.totalorder %v806, 2
    %v812 = vxor.u32 %v795, 2147483648
    %v813 = vsel %vm811, %v812, %v803
    %v814 = vsel %vm807, %v810, %v813
    %v815 = vsel %vm804, nan, %v814
    %v816 = vand.u32 2147483647, %v38
    %vm817 = vcmp.le.f32.partialorder %v816, 0.7853982
    %vm818 = vcmp.lt.s32.totalorder %v38, 0
    %v819 = vand.u32 %v38, 2139095040
    %v820 = vshrl.u32 %v819, 23
    %v821 = vsub.s32 %v820, 127
    %v822 = vand.u32 2147483647, %v38
    %v823 = vand.u32 %v822, 8388607
    %v824 = vor.u32 %v823, 8388608
    %v825 = vsub.s32 0, %v824
    %v826 = vadd.s32 %v821, 1
    %vm827 = vcmp.gt.s32.totalorder %v826, 0
    %v828 = vsel %vm827, %v826, 0
    %v829 = vshrl.u32 %v828, 5
    %v830 = vand.u32 %v828, 31
    %v831 = vsub.s32 32, %v830
    %v832 = vshrl.u32 683565275, %v831
    %v833 = vshll.u32 683565275, %v830
    %v834 = vshrl.u32 2475754826, %v831
    %v835 = vor.u32 %v833, %v834
    %v836 = vshll.u32 2475754826, %v830
    %v837 = vshrl.u32 2131351028, %v831
    %v838 = vor.u32 %v836, %v837
    %v839 = vshll.u32 2131351028, %v830
    %v840 = vshrl.u32 2102212464, %v831
    %v841 = vor.u32 %v839, %v840
    %v842 = vshll.u32 2102212464, %v830
    %v843 = vshrl.u32 920167782, %v831
    %v844 = vor.u32 %v842, %v843
    %v845 = vshll.u32 920167782, %v830
    %v846 = vshrl.u32 1326507024, %v831
    %v847 = vor.u32 %v845, %v846
    %vm848 = vcmp.lt.s32.totalorder %v829, 1
    %vm849 = vcmp.lt.s32.totalorder %v829, 2
    %vm850 = vcmp.lt.s32.totalorder %v829, 3
    %vm851 = vcmp.lt.s32.totalorder %v829, 4
    %v852 = vsel %vm848, %v832, %v835
    %v853 = vsel %vm851, %v841, 2102212464
    %v854 = vsel %vm850, %v838, %v853
    %v855 = vsel %vm849, %v852, %v854
    %v856 = vsel %vm848, %v835, %v838
    %v857 = vsel %vm851, %v844, 920167782
    %v858 = vsel %vm850, %v841, %v857
    %v859 = vsel %vm849, %v856, %v858
    %v860 = vsel %vm848, %v838, %v841
    %v861 = vsel %vm851, %v847, 1326507024
    %v862 = vsel %vm850, %v844, %v861
    %v863 = vsel %vm849, %v860, %v862
    %v864 = vshll.u32 %v824, 8
    %v865 = vand.u32 %v864, 65535
    %v866 = vshrl.u32 %v864, 16
    %v867 = vand.u32 %v863, 65535
    %v868 = vshrl.u32 %v863, 16
    %v869 = vmul.u32 %v865, %v867
    %v870 = vmul.u32 %v865, %v868
    %v871 = vmul.u32 %v866, %v867
    %v872 = vmul.u32 %v866, %v868
    %v873 = vshll.u32 %v870, 16
    %v874 = vshrl.u32 %v870, 16
    %v875 = vshll.u32 %v871, 16
    %v876 = vshrl.u32 %v871, 16
    %vm877 = vc.u32 %v869, %v873
    %v878 = vsel %vm877, 1, 0
    %v879 = vadd.s32 %v869, %v873
    %v880 = vadd.s32 %v872, %v878
    %vm881 = vc.u32 %v879, %v875
    %v882 = vsel %vm881, 1, 0
    %v883 = vadd.s32 %v879, %v875
    %v884 = vadd.s32 %v880, %v882
    %v885 = vadd.s32 %v884, %v874
    %v886 = vadd.s32 %v885, %v876
    %v887 = vand.u32 %v864, 65535
    %v888 = vshrl.u32 %v864, 16
    %v889 = vand.u32 %v859, 65535
    %v890 = vshrl.u32 %v859, 16
    %v891 = vmul.u32 %v887, %v889
    %v892 = vmul.u32 %v887, %v890
    %v893 = vmul.u32 %v888, %v889
    %v894 = vmul.u32 %v888, %v890
    %v895 = vshll.u32 %v892, 16
    %v896 = vshrl.u32 %v892, 16
    %v897 = vshll.u32 %v893, 16
    %v898 = vshrl.u32 %v893, 16
    %vm899 = vc.u32 %v891, %v895
    %v900 = vsel %vm899, 1, 0
    %v901 = vadd.s32 %v891, %v895
    %v902 = vadd.s32 %v894, %v900
    %vm903 = vc.u32 %v901, %v897
    %v904 = vsel %vm903, 1, 0
    %v905 = vadd.s32 %v901, %v897
    %v906 = vadd.s32 %v902, %v904
    %v907 = vadd.s32 %v906, %v896
    %v908 = vadd.s32 %v907, %v898
    %v909 = vmul.u32 %v864, %v855
    %v910 = vadd.s32 %v886, %v905
    %vm911 = vc.u32 %v886, %v905
    %v912 = vadd.s32 %v908, 1
    %v913 = vsel %vm911, %v912, %v908
    %v914 = vadd.s32 %v909, %v913
    %v915 = vadd.s32 %v914, 536870912
    %v916 = vshrl.u32 %v915, 30
    %v917 = vshll.u32 %v916, 30
    %v918 = vsub.s32 %v914, %v917
    %vm919 = vcmp.lt.s32.totalorder %v918, 0
    %v920 = vsub.s32 0, %v918
    %v921 = vsel %vm919, %v920, %v918
    %v922 = vclz %v921
    %v923 = vsub.s32 %v922, 2
    %vm924 = vcmp.gt.s32.totalorder 0, %v923
    %v925 = vsel %vm924, 0, %v923
    %v926 = vsub.s32 32, %v925
    %v927 = vshll.u32 %v918, %v925
    %v928 = vshrl.u32 %v910, %v926
    %v929 = vor.u32 %v927, %v928
    %v930 = vsub.s32 4294967266, %v925
    %v931 = vadd.s32 %v930, 127
    %v932 = vshll.u32 %v931, 23
    %v933 = vor.u32 4788187, %v932
    %v934 = vand.u32 2147483647, %v933
    %v936 = vcvt.s32.f32 %v929
    %v937 = vmul.f32 %v936, %v934
    %v938 = vxor.u32 %v937, 2147483648
    %v939 = vsel %vm818, %v938, %v937
    %v940 = vsub.s32 4, %v916
    %v941 = vsel %vm818, %v940, %v916
    %v942 = vsel %vm817, %v38, %v939
    %v943 = vsel %vm817, 0, %v941
    %v944 = vmul.f32 %v942, %v942
    %v945 = vmul.f32 %v944, -0.001358992
    %v946 = vadd.f32 %v945, 0.041655596
    %v947 = vmul.f32 %v944, %v946
    %v948 = vadd.f32 %v947, -0.4999988
    %v949 = vmul.f32 %v944, %v948
    %v950 = vadd.f32 1.0, %v949
    %v951 = vmul.f32 %v942, %v942
    %v952 = vmul.f32 %v951, -0.00019511016
    %v953 = vadd.f32 %v952, 0.008332121
    %v954 = vmul.f32 %v951, %v953
    %v955 = vadd.f32 %v954, -0.16666654
    %v956 = vmul.f32 %v951, %v955
    %v957 = vadd.f32 %v956, 1.0
    %v958 = vmul.f32 %v957, %v942
    %vm959 = vweird.f32 %v38
    %v960 = vadd.s32 %v943, 3
    %v961 = vand.u32 %v960, 3
    %vm962 = vcmp.lt.s32.totalorder %v961, 2
    %vm963 = vcmp.eq.s32.totalorder %v961, 0
    %v964 = vxor.u32 %v958, 2147483648
    %v965 = vsel %vm963, %v950, %v964
    %vm966 = vcmp.eq.s32.totalorder %v961, 2
    %v967 = vxor.u32 %v950, 2147483648
    %v968 = vsel %vm966, %v967, %v958
    %v969 = vsel %vm962, %v965, %v968
    %v970 = vsel %vm959, nan, %v969
    %v971 = vand.u32 2147483647, %v39
    %vm972 = vcmp.le.f32.partialorder %v971, 0.7853982
    %vm973 = vcmp.lt.s32.totalorder %v39, 0
    %v974 = vand.u32 %v39, 2139095040
    %v975 = vshrl.u32 %v974, 23
    %v976 = vsub.s32 %v975, 127
    %v977 = vand.u32 2147483647, %v39
    %v978 = vand.u32 %v977, 8388607
    %v979 = vor.u32 %v978, 8388608
    %v980 = vsub.s32 0, %v979
    %v981 = vadd.s32 %v976, 1
    %vm982 = vcmp.gt.s32.totalorder %v981, 0
    %v983 = vsel %vm982, %v981, 0
    %v984 = vshrl.u32 %v983, 5
    %v985 = vand.u32 %v983, 31
    %v986 = vsub.s32 32, %v985
    %v987 = vshrl.u32 683565275, %v986
    %v988 = vshll.u32 683565275, %v985
    %v989 = vshrl.u32 2475754826, %v986
    %v990 = vor.u32 %v988, %v989
    %v991 = vshll.u32 2475754826, %v985
    %v992 = vshrl.u32 2131351028, %v986
    %v993 = vor.u32 %v991, %v992
    %v994 = vshll.u32 2131351028, %v985
    %v995 = vshrl.u32 2102212464, %v986
    %v996 = vor.u32 %v994, %v995
    %v997 = vshll.u32 2102212464, %v985
    %v998 = vshrl.u32 920167782, %v986
    %v999 = vor.u32 %v997, %v998
    %v1000 = vshll.u32 920167782, %v985
    %v1001 = vshrl.u32 1326507024, %v986
    %v1002 = vor.u32 %v1000, %v1001
    %vm1003 = vcmp.lt.s32.totalorder %v984, 1
    %vm1004 = vcmp.lt.s32.totalorder %v984, 2
    %vm1005 = vcmp.lt.s32.totalorder %v984, 3
    %vm1006 = vcmp.lt.s32.totalorder %v984, 4
    %v1007 = vsel %vm1003, %v987, %v990
    %v1008 = vsel %vm1006, %v996, 2102212464
    %v1009 = vsel %vm1005, %v993, %v1008
    %v1010 = vsel %vm1004, %v1007, %v1009
    %v1011 = vsel %vm1003, %v990, %v993
    %v1012 = vsel %vm1006, %v999, 920167782
    %v1013 = vsel %vm1005, %v996, %v1012
    %v1014 = vsel %vm1004, %v1011, %v1013
    %v1015 = vsel %vm1003, %v993, %v996
    %v1016 = vsel %vm1006, %v1002, 1326507024
    %v1017 = vsel %vm1005, %v999, %v1016
    %v1018 = vsel %vm1004, %v1015, %v1017
    %v1019 = vshll.u32 %v979, 8
    %v1020 = vand.u32 %v1019, 65535
    %v1021 = vshrl.u32 %v1019, 16
    %v1022 = vand.u32 %v1018, 65535
    %v1023 = vshrl.u32 %v1018, 16
    %v1024 = vmul.u32 %v1020, %v1022
    %v1025 = vmul.u32 %v1020, %v1023
    %v1026 = vmul.u32 %v1021, %v1022
    %v1027 = vmul.u32 %v1021, %v1023
    %v1028 = vshll.u32 %v1025, 16
    %v1029 = vshrl.u32 %v1025, 16
    %v1030 = vshll.u32 %v1026, 16
    %v1031 = vshrl.u32 %v1026, 16
    %vm1032 = vc.u32 %v1024, %v1028
    %v1033 = vsel %vm1032, 1, 0
    %v1034 = vadd.s32 %v1024, %v1028
    %v1035 = vadd.s32 %v1027, %v1033
    %vm1036 = vc.u32 %v1034, %v1030
    %v1037 = vsel %vm1036, 1, 0
    %v1038 = vadd.s32 %v1034, %v1030
    %v1039 = vadd.s32 %v1035, %v1037
    %v1040 = vadd.s32 %v1039, %v1029
    %v1041 = vadd.s32 %v1040, %v1031
    %v1042 = vand.u32 %v1019, 65535
    %v1043 = vshrl.u32 %v1019, 16
    %v1044 = vand.u32 %v1014, 65535
    %v1045 = vshrl.u32 %v1014, 16
    %v1046 = vmul.u32 %v1042, %v1044
    %v1047 = vmul.u32 %v1042, %v1045
    %v1048 = vmul.u32 %v1043, %v1044
    %v1049 = vmul.u32 %v1043, %v1045
    %v1050 = vshll.u32 %v1047, 16
    %v1051 = vshrl.u32 %v1047, 16
    %v1052 = vshll.u32 %v1048, 16
    %v1053 = vshrl.u32 %v1048, 16
    %vm1054 = vc.u32 %v1046, %v1050
    %v1055 = vsel %vm1054, 1, 0
    %v1056 = vadd.s32 %v1046, %v1050
    %v1057 = vadd.s32 %v1049, %v1055
    %vm1058 = vc.u32 %v1056, %v1052
    %v1059 = vsel %vm1058, 1, 0
    %v1060 = vadd.s32 %v1056, %v1052
    %v1061 = vadd.s32 %v1057, %v1059
    %v1062 = vadd.s32 %v1061, %v1051
    %v1063 = vadd.s32 %v1062, %v1053
    %v1064 = vmul.u32 %v1019, %v1010
    %v1065 = vadd.s32 %v1041, %v1060
    %vm1066 = vc.u32 %v1041, %v1060
    %v1067 = vadd.s32 %v1063, 1
    %v1068 = vsel %vm1066, %v1067, %v1063
    %v1069 = vadd.s32 %v1064, %v1068
    %v1070 = vadd.s32 %v1069, 536870912
    %v1071 = vshrl.u32 %v1070, 30
    %v1072 = vshll.u32 %v1071, 30
    %v1073 = vsub.s32 %v1069, %v1072
    %vm1074 = vcmp.lt.s32.totalorder %v1073, 0
    %v1075 = vsub.s32 0, %v1073
    %v1076 = vsel %vm1074, %v1075, %v1073
    %v1077 = vclz %v1076
    %v1078 = vsub.s32 %v1077, 2
    %vm1079 = vcmp.gt.s32.totalorder 0, %v1078
    %v1080 = vsel %vm1079, 0, %v1078
    %v1081 = vsub.s32 32, %v1080
    %v1082 = vshll.u32 %v1073, %v1080
    %v1083 = vshrl.u32 %v1065, %v1081
    %v1084 = vor.u32 %v1082, %v1083
    %v1085 = vsub.s32 4294967266, %v1080
    %v1086 = vadd.s32 %v1085, 127
    %v1087 = vshll.u32 %v1086, 23
    %v1088 = vor.u32 4788187, %v1087
    %v1089 = vand.u32 2147483647, %v1088
    %v1091 = vcvt.s32.f32 %v1084
    %v1092 = vmul.f32 %v1091, %v1089
    %v1093 = vxor.u32 %v1092, 2147483648
    %v1094 = vsel %vm973, %v1093, %v1092
    %v1095 = vsub.s32 4, %v1071
    %v1096 = vsel %vm973, %v1095, %v1071
    %v1097 = vsel %vm972, %v39, %v1094
    %v1098 = vsel %vm972, 0, %v1096
    %v1099 = vmul.f32 %v1097, %v1097
    %v1100 = vmul.f32 %v1099, -0.001358992
    %v1101 = vadd.f32 %v1100, 0.041655596
    %v1102 = vmul.f32 %v1099, %v1101
    %v1103 = vadd.f32 %v1102, -0.4999988
    %v1104 = vmul.f32 %v1099, %v1103
    %v1105 = vadd.f32 1.0, %v1104
    %v1106 = vmul.f32 %v1097, %v1097
    %v1107 = vmul.f32 %v1106, -0.00019511016
    %v1108 = vadd.f32 %v1107, 0.008332121
    %v1109 = vmul.f32 %v1106, %v1108
    %v1110 = vadd.f32 %v1109, -0.16666654
    %v1111 = vmul.f32 %v1106, %v1110
    %v1112 = vadd.f32 %v1111, 1.0
    %v1113 = vmul.f32 %v1112, %v1097
    %vm1114 = vweird.f32 %v39
    %v1115 = vadd.s32 %v1098, 3
    %v1116 = vand.u32 %v1115, 3
    %vm1117 = vcmp.lt.s32.totalorder %v1116, 2
    %vm1118 = vcmp.eq.s32.totalorder %v1116, 0
    %v1119 = vxor.u32 %v1113, 2147483648
    %v1120 = vsel %vm1118, %v1105, %v1119
    %vm1121 = vcmp.eq.s32.totalorder %v1116, 2
    %v1122 = vxor.u32 %v1105, 2147483648
    %v1123 = vsel %vm1121, %v1122, %v1113
    %v1124 = vsel %vm1117, %v1120, %v1123
    %v1125 = vsel %vm1114, nan, %v1124
    %v1126 = vand.u32 2147483647, %v40
    %vm1127 = vcmp.le.f32.partialorder %v1126, 0.7853982
    %vm1128 = vcmp.lt.s32.totalorder %v40, 0
    %v1129 = vand.u32 %v40, 2139095040
    %v1130 = vshrl.u32 %v1129, 23
    %v1131 = vsub.s32 %v1130, 127
    %v1132 = vand.u32 2147483647, %v40
    %v1133 = vand.u32 %v1132, 8388607
    %v1134 = vor.u32 %v1133, 8388608
    %v1135 = vsub.s32 0, %v1134
    %v1136 = vadd.s32 %v1131, 1
    %vm1137 = vcmp.gt.s32.totalorder %v1136, 0
    %v1138 = vsel %vm1137, %v1136, 0
    %v1139 = vshrl.u32 %v1138, 5
    %v1140 = vand.u32 %v1138, 31
    %v1141 = vsub.s32 32, %v1140
    %v1142 = vshrl.u32 683565275, %v1141
    %v1143 = vshll.u32 683565275, %v1140
    %v1144 = vshrl.u32 2475754826, %v1141
    %v1145 = vor.u32 %v1143, %v1144
    %v1146 = vshll.u32 2475754826, %v1140
    %v1147 = vshrl.u32 2131351028, %v1141
    %v1148 = vor.u32 %v1146, %v1147
    %v1149 = vshll.u32 2131351028, %v1140
    %v1150 = vshrl.u32 2102212464, %v1141
    %v1151 = vor.u32 %v1149, %v1150
    %v1152 = vshll.u32 2102212464, %v1140
    %v1153 = vshrl.u32 920167782, %v1141
    %v1154 = vor.u32 %v1152, %v1153
    %v1155 = vshll.u32 920167782, %v1140
    %v1156 = vshrl.u32 1326507024, %v1141
    %v1157 = vor.u32 %v1155, %v1156
    %vm1158 = vcmp.lt.s32.totalorder %v1139, 1
    %vm1159 = vcmp.lt.s32.totalorder %v1139, 2
    %vm1160 = vcmp.lt.s32.totalorder %v1139, 3
    %vm1161 = vcmp.lt.s32.totalorder %v1139, 4
    %v1162 = vsel %vm1158, %v1142, %v1145
    %v1163 = vsel %vm1161, %v1151, 2102212464
    %v1164 = vsel %vm1160, %v1148, %v1163
    %v1165 = vsel %vm1159, %v1162, %v1164
    %v1166 = vsel %vm1158, %v1145, %v1148
    %v1167 = vsel %vm1161, %v1154, 920167782
    %v1168 = vsel %vm1160, %v1151, %v1167
    %v1169 = vsel %vm1159, %v1166, %v1168
    %v1170 = vsel %vm1158, %v1148, %v1151
    %v1171 = vsel %vm1161, %v1157, 1326507024
    %v1172 = vsel %vm1160, %v1154, %v1171
    %v1173 = vsel %vm1159, %v1170, %v1172
    %v1174 = vshll.u32 %v1134, 8
    %v1175 = vand.u32 %v1174, 65535
    %v1176 = vshrl.u32 %v1174, 16
    %v1177 = vand.u32 %v1173, 65535
    %v1178 = vshrl.u32 %v1173, 16
    %v1179 = vmul.u32 %v1175, %v1177
    %v1180 = vmul.u32 %v1175, %v1178
    %v1181 = vmul.u32 %v1176, %v1177
    %v1182 = vmul.u32 %v1176, %v1178
    %v1183 = vshll.u32 %v1180, 16
    %v1184 = vshrl.u32 %v1180, 16
    %v1185 = vshll.u32 %v1181, 16
    %v1186 = vshrl.u32 %v1181, 16
    %vm1187 = vc.u32 %v1179, %v1183
    %v1188 = vsel %vm1187, 1, 0
    %v1189 = vadd.s32 %v1179, %v1183
    %v1190 = vadd.s32 %v1182, %v1188
    %vm1191 = vc.u32 %v1189, %v1185
    %v1192 = vsel %vm1191, 1, 0
    %v1193 = vadd.s32 %v1189, %v1185
    %v1194 = vadd.s32 %v1190, %v1192
    %v1195 = vadd.s32 %v1194, %v1184
    %v1196 = vadd.s32 %v1195, %v1186
    %v1197 = vand.u32 %v1174, 65535
    %v1198 = vshrl.u32 %v1174, 16
    %v1199 = vand.u32 %v1169, 65535
    %v1200 = vshrl.u32 %v1169, 16
    %v1201 = vmul.u32 %v1197, %v1199
    %v1202 = vmul.u32 %v1197, %v1200
    %v1203 = vmul.u32 %v1198, %v1199
    %v1204 = vmul.u32 %v1198, %v1200
    %v1205 = vshll.u32 %v1202, 16
    %v1206 = vshrl.u32 %v1202, 16
    %v1207 = vshll.u32 %v1203, 16
    %v1208 = vshrl.u32 %v1203, 16
    %vm1209 = vc.u32 %v1201, %v1205
    %v1210 = vsel %vm1209, 1, 0
    %v1211 = vadd.s32 %v1201, %v1205
    %v1212 = vadd.s32 %v1204, %v1210
    %vm1213 = vc.u32 %v1211, %v1207
    %v1214 = vsel %vm1213, 1, 0
    %v1215 = vadd.s32 %v1211, %v1207
    %v1216 = vadd.s32 %v1212, %v1214
    %v1217 = vadd.s32 %v1216, %v1206
    %v1218 = vadd.s32 %v1217, %v1208
    %v1219 = vmul.u32 %v1174, %v1165
    %v1220 = vadd.s32 %v1196, %v1215
    %vm1221 = vc.u32 %v1196, %v1215
    %v1222 = vadd.s32 %v1218, 1
    %v1223 = vsel %vm1221, %v1222, %v1218
    %v1224 = vadd.s32 %v1219, %v1223
    %v1225 = vadd.s32 %v1224, 536870912
    %v1226 = vshrl.u32 %v1225, 30
    %v1227 = vshll.u32 %v1226, 30
    %v1228 = vsub.s32 %v1224, %v1227
    %vm1229 = vcmp.lt.s32.totalorder %v1228, 0
    %v1230 = vsub.s32 0, %v1228
    %v1231 = vsel %vm1229, %v1230, %v1228
    %v1232 = vclz %v1231
    %v1233 = vsub.s32 %v1232, 2
    %vm1234 = vcmp.gt.s32.totalorder 0, %v1233
    %v1235 = vsel %vm1234, 0, %v1233
    %v1236 = vsub.s32 32, %v1235
    %v1237 = vshll.u32 %v1228, %v1235
    %v1238 = vshrl.u32 %v1220, %v1236
    %v1239 = vor.u32 %v1237, %v1238
    %v1240 = vsub.s32 4294967266, %v1235
    %v1241 = vadd.s32 %v1240, 127
    %v1242 = vshll.u32 %v1241, 23
    %v1243 = vor.u32 4788187, %v1242
    %v1244 = vand.u32 2147483647, %v1243
    %v1246 = vcvt.s32.f32 %v1239
    %v1247 = vmul.f32 %v1246, %v1244
    %v1248 = vxor.u32 %v1247, 2147483648
    %v1249 = vsel %vm1128, %v1248, %v1247
    %v1250 = vsub.s32 4, %v1226
    %v1251 = vsel %vm1128, %v1250, %v1226
    %v1252 = vsel %vm1127, %v40, %v1249
    %v1253 = vsel %vm1127, 0, %v1251
    %v1254 = vmul.f32 %v1252, %v1252
    %v1255 = vmul.f32 %v1254, -0.001358992
    %v1256 = vadd.f32 %v1255, 0.041655596
    %v1257 = vmul.f32 %v1254, %v1256
    %v1258 = vadd.f32 %v1257, -0.4999988
    %v1259 = vmul.f32 %v1254, %v1258
    %v1260 = vadd.f32 1.0, %v1259
    %v1261 = vmul.f32 %v1252, %v1252
    %v1262 = vmul.f32 %v1261, -0.00019511016
    %v1263 = vadd.f32 %v1262, 0.008332121
    %v1264 = vmul.f32 %v1261, %v1263
    %v1265 = vadd.f32 %v1264, -0.16666654
    %v1266 = vmul.f32 %v1261, %v1265
    %v1267 = vadd.f32 %v1266, 1.0
    %v1268 = vmul.f32 %v1267, %v1252
    %vm1269 = vweird.f32 %v40
    %v1270 = vadd.s32 %v1253, 3
    %v1271 = vand.u32 %v1270, 3
    %vm1272 = vcmp.lt.s32.totalorder %v1271, 2
    %vm1273 = vcmp.eq.s32.totalorder %v1271, 0
    %v1274 = vxor.u32 %v1268, 2147483648
    %v1275 = vsel %vm1273, %v1260, %v1274
    %vm1276 = vcmp.eq.s32.totalorder %v1271, 2
    %v1277 = vxor.u32 %v1260, 2147483648
    %v1278 = vsel %vm1276, %v1277, %v1268
    %v1279 = vsel %vm1272, %v1275, %v1278
    %v1280 = vsel %vm1269, nan, %v1279
    %1281 = vst [vmem:[#allocation5] sm:$0xff] %v195
    %1282 = vst [vmem:[#allocation5 + $0x8] sm:$0xff] %v350
    %1283 = vst [vmem:[#allocation5 + $0x10] sm:$0xff] %v505
    %1284 = vst [vmem:[#allocation5 + $0x18] sm:$0xff] %v660
    %1285 = vst [vmem:[#allocation5 + $0x20] sm:$0xff] %v815
    %1286 = vst [vmem:[#allocation5 + $0x28] sm:$0xff] %v970
    %1287 = vst [vmem:[#allocation5 + $0x30] sm:$0xff] %v1125
    %1288 = vst [vmem:[#allocation5 + $0x38] sm:$0xff] %v1280
    // Predicated region
    $region10: #{tpu_custom_call.1} parent=1 // pred_check
      _
    $region11: #{tpu_custom_call.1} parent=1 // pred_check_branch
      %1290 = sbr.rel (0) target = $region13
    $region12: #{tpu_custom_call.1} parent=1 // pred_region
      %1292 = vsyncadd [#allocation4], 768
      %s1293 = sshll.u32 [#allocation5], 4
      %s1294 = int_to_ptr.vmem [resolvable:$true] %s1293
      %s1295 = sshll.u32 %s1, 4
      %s1296 = int_to_ptr.hbm [resolvable:$true] %s1295
      %1301 = dma.vmem_to_hbm [thread:$0]  %s1294, 256, %s1296, [#allocation4], 256, 256, 16
    $region13: #{tpu_custom_call.1} parent=1 // pred_fallthru
      _
    // Predicated region
    $region14: #{tpu_custom_call.1} parent=1 // pred_check
      _
    $region15: #{tpu_custom_call.1} parent=1 // pred_check_branch
      %1303 = sbr.rel (0) target = $region17
    $region16: #{tpu_custom_call.1} parent=1 // pred_region
      %1305 = dma.done [#allocation4], 1024
    $region17: #{tpu_custom_call.1} parent=1 // pred_fallthru
      _
    %1306 = vsyncpa [#allocation3], 1
    %1307 = vsyncpa [#allocation4], 1

</llo_original>
